<compile_context>
chip_gen: v5e
topology: v5e:2x2
jax: 0.10.0
libtpu: 0.0.40
codegen_flags: <defaults>
</compile_context>

<pallas_src>
import jax
import jax.numpy as jnp
from jax.experimental import pallas as pl
from jax.experimental.pallas import tpu as pltpu

_MiB = 1 << 20


# ----------------------------------------------------------------------------
# Primary debug/demo path: whole-array HBM -> HBM DMA (no VMEM round-trip).
# ----------------------------------------------------------------------------
def _hbm_copy_kernel(x_hbm, o_hbm, sem):
    cp = pltpu.make_async_copy(x_hbm, o_hbm, sem)
    cp.start()
    cp.wait()


def pallas_identity(image, *, pin_side_effect=False):
    """Identity copy of `image` as a single HBM->HBM DMA descriptor."""
    nbytes = image.size * image.dtype.itemsize
    return pl.pallas_call(
        _hbm_copy_kernel,
        out_shape=jax.ShapeDtypeStruct(image.shape, image.dtype),
        in_specs=[pl.BlockSpec(memory_space=pl.ANY)],
        out_specs=pl.BlockSpec(memory_space=pl.ANY),
        scratch_shapes=[pltpu.SemaphoreType.DMA],
        compiler_params=pltpu.CompilerParams(has_side_effects=pin_side_effect),
        cost_estimate=pl.CostEstimate(
            flops=0, transcendentals=0, bytes_accessed=2 * nbytes),
    )(image)


# ----------------------------------------------------------------------------
# Secondary path: lane-dense, tiled, pipelined VMEM identity (kept as a
# demonstration of generation-aware tiling; the DMA path above is faster).
# ----------------------------------------------------------------------------
def _identity_kernel(x_ref, o_ref):
    o_ref[...] = x_ref[...]


def _sublane(itemsize):
    # Sub-32-bit dtypes pack along sublanes: 8 rows for 4B, 16 for 2B, 32 for 1B.
    return max(8, 32 // max(1, itemsize))


def _tiling_budget():
    """(per-block byte budget, vmem_limit_bytes) sized per TPU generation."""
    kind = ""
    try:
        kind = jax.devices()[0].device_kind.lower()
    except Exception:  # pragma: no cover - defensive
        pass
    if "v7" in kind:
        # 64 MiB physical VMEM, ~3.2 TB/s HBM: big blocks amortize the
        # ~0.35 us/step overhead; 4 x 8 MiB live blocks + headroom < 64 MiB.
        return 8 * _MiB, 48 * _MiB
    if "v5 lite" in kind or "v5e" in kind or "v5lite" in kind:
        # Stay well under v5e's 16 MiB default scoped-VMEM limit.
        return 2 * _MiB, 14 * _MiB
    # v6e-class default (also safe for v5p / unknown chips).
    return 4 * _MiB, 28 * _MiB


def _slab_and_pad(total, itemsize):
    """Lane-dense (rows, cols) factorization of `total`; pad if needed."""
    sub = _sublane(itemsize)
    for cols in range(2048, 0, -128):
        if total % cols == 0 and total // cols >= sub:
            return total // cols, cols, 0
    # No good divisor: pad the flat array up to a full (sub x cols) slab so we
    # keep unmasked, fully packed vregs and row tiling on awkward sizes.
    cols = 1024 if total >= sub * 1024 else 128
    rows = max(pl.cdiv(total, cols), sub)
    return rows, cols, rows * cols - total


def _row_tile(rows, cols, itemsize, block_budget):
    sub = _sublane(itemsize)
    if rows <= sub:
        return rows  # full-extent block: always legal
    budget_rows = max(sub, (block_budget // max(1, cols * itemsize)) // sub * sub)
    # No divisibility requirement: grid uses cdiv and Pallas pads the last
    # (possibly partial) block.  tr is either a multiple of `sub` or == rows.
    return min(budget_rows, rows)


def pallas_identity_tiled(image, *, pin_side_effect=False):
    """Tiled, pipelined identity copy through VMEM (generation-aware blocks)."""
    flat = image.reshape(-1)
    total = flat.size
    rows, cols, pad = _slab_and_pad(total, flat.dtype.itemsize)
    if pad:
        flat = jnp.pad(flat, (0, pad))
    x2d = flat.reshape(rows, cols)

    block_budget, vmem_limit = _tiling_budget()
    tr = _row_tile(rows, cols, x2d.dtype.itemsize, block_budget)
    nbytes = x2d.size * x2d.dtype.itemsize

    out2d = pl.pallas_call(
        _identity_kernel,
        out_shape=jax.ShapeDtypeStruct((rows, cols), x2d.dtype),
        grid_spec=pl.GridSpec(
            grid=(pl.cdiv(rows, tr),),
            in_specs=[pl.BlockSpec((tr, cols), lambda i: (i, 0))],
            out_specs=pl.BlockSpec((tr, cols), lambda i: (i, 0)),
        ),
        compiler_params=pltpu.CompilerParams(
            dimension_semantics=("parallel",),
            vmem_limit_bytes=vmem_limit,
            has_side_effects=pin_side_effect,
        ),
        cost_estimate=pl.CostEstimate(
            flops=0, transcendentals=0, bytes_accessed=2 * nbytes),
    )(x2d)

    out_flat = out2d.reshape(-1)
    if pad:
        out_flat = out_flat[:total]
    return out_flat.reshape(image.shape)


# ----------------------------------------------------------------------------
# Module analogue.
# ----------------------------------------------------------------------------
class AbstractDetectionModelPallas:
    """JAX/Pallas analogue of AbstractDetectionModel."""

    def __init__(self, *, run_identity_kernel=False, **kwargs):
        # TODO(synk): BackboneFactory / get_valid resolve an arbitrary external
        # backbone by name; it is never invoked in forward, so no parameters
        # are built here.
        self.backbone = None
        self._run_identity_kernel = run_identity_kernel

    def forward(self, image):
        # Reference forward is `pass`: returns None, touches no data.
        # Default path is a true no-op (zero HBM traffic, no device sync).
        if self._run_identity_kernel:
            # Debug-only HBM->HBM DMA copy; pinned so a surrounding jit cannot
            # dead-code-eliminate it even though the result is discarded.
            pallas_identity(image, pin_side_effect=True)
        return None

    __call__ = forward


if __name__ == "__main__":
    key = jax.random.PRNGKey(0)
    # Small NCHW shape consistent with a detection-model image input.
    image = jax.random.normal(key, (2, 4, 16, 16), dtype=jnp.float32)

    # 1) Primary DMA identity path.
    out = pallas_identity(image)
    jax.block_until_ready(out)
    assert out.shape == image.shape and out.dtype == image.dtype
    assert bool(jnp.array_equal(out, image))

    # 2) Tiled VMEM path (generation-aware blocks), including padded fallback
    #    on an awkward size and a packed (bf16) dtype.
    out_t = pallas_identity_tiled(image)
    jax.block_until_ready(out_t)
    assert bool(jnp.array_equal(out_t, image))

    odd = jax.random.normal(key, (3, 5, 7), dtype=jnp.float32)
    out_odd = pallas_identity_tiled(odd)
    jax.block_until_ready(out_odd)
    assert bool(jnp.array_equal(out_odd, odd))

    img_bf16 = image.astype(jnp.bfloat16)
    out_bf16 = pallas_identity_tiled(img_bf16)
    jax.block_until_ready(out_bf16)
    assert bool(jnp.array_equal(out_bf16, img_bf16))

    # 3) Module forward semantics: a true no-op returning None (reference `pass`).
    model = AbstractDetectionModelPallas(backbone="synthetic")
    assert model(image) is None

    dbg_model = AbstractDetectionModelPallas(
        backbone="synthetic", run_identity_kernel=True)
    assert dbg_model(image) is None

    print("KERNEL_OK")
</pallas_src>

<mosaic_0001>
module attributes {stable_mosaic.version = 11 : i64} {
  func.func @_hbm_copy_kernel(%arg0: memref<2x4x16x16xf32, #tpu.memory_space<any>>, %arg1: memref<2x4x16x16xf32, #tpu.memory_space<any>>, %arg2: memref<!tpu.dma_semaphore, #tpu.memory_space<semaphore_mem>>) attributes {dimension_semantics = [], scalar_prefetch = 0 : i64, scratch_operands = 1 : i64, tpu.core_type = #tpu.core_type<tc>} {
    tpu.enqueue_dma source(%arg0 : memref<2x4x16x16xf32, #tpu.memory_space<any>>) target(%arg1 : memref<2x4x16x16xf32, #tpu.memory_space<any>>) target_semaphore(%arg2 : memref<!tpu.dma_semaphore, #tpu.memory_space<semaphore_mem>>)
    tpu.wait_dma2 semaphore(%arg2 : memref<!tpu.dma_semaphore, #tpu.memory_space<semaphore_mem>>) src(%arg0 : memref<2x4x16x16xf32, #tpu.memory_space<any>>) dst(%arg1 : memref<2x4x16x16xf32, #tpu.memory_space<any>>)
    return
  }
}

</mosaic_0001>

<llo_original>
// kernel: tpu_custom_call.1
$region0: #{tpu_custom_call.1}
  #allocation0 [shape = 'u32[]', space=smem, size = 0x4, offset = 0x4, fixed_abs, tag = 'smem constant byte address 0x4 - core index']
  #allocation1 [shape = 'u32[72,128]{1,0:T(1,128)}', space=vmem, size = 0x9000, scoped, tag = 'internal scratch']
  #allocation2 [shape = 's32[1]{0}', space=sflag, size = 0x4, scoped, tag = 'scratch operand']
  #allocation3 [shape = 's32[]', space=sflag, size = 0x4, offset = 0, fixed_abs, tag = 'sflag constant byte address 0x0 - dummy sync flag']
  #allocation4 [shape = 'u32[0]{0}', space=smem, size = 0, offset = 0, fixed_abs, tag = 'smem constant byte address 0x0 - null']
  %s0 = inlined_call_operand.hbm [shape: f32[2,4,16,16], index: 0, kind: input, shape index: {}]
  %s1 = inlined_call_operand.hbm [shape: f32[2,4,16,16], index: 1, kind: output, shape index: {}]
  %s2 = sld [smem:[#allocation0]]
  $region2: #{tpu_custom_call.1} parent=0
    _
  %s4 = ssub.s32 1, %s2
  %s5 = scalar_select 0, %s4, %s2
  %s7 = sshll.u32 1, 14
  %s8 = sxor.u32 4294967295, %s7
  %s10 = sshll.u32 %s0, 4
  %s11 = int_to_ptr.hbm [resolvable:$true] %s10
  %s12 = sshll.u32 %s1, 4
  %s13 = int_to_ptr.hbm [resolvable:$true] %s12
  %16 = dma.general %s11, 2048, %s13, [#allocation2], [#allocation3], [#allocation4], 0, 0
  %s17 = smul.u32 2, 4
  %s18 = smul.u32 %s17, 16
  %s19 = smul.u32 %s18, 1
  %s20 = sshll.u32 %s19, 4
  %21 = dma.done [#allocation2], %s20
  %22 = vsyncmov [#allocation2]
  %s23 = vpop.sfrf %22
  %p24 = scmp.eq.s32.totalorder %s23, 0
  %p25 = pneg %p24
  %27 = shalt.err (%p25)

</llo_original>
